<compile_context>
chip_gen: v6e
topology: v6e:2x2x1
jax: 0.10.0
libtpu: 0.0.40
codegen_flags: <defaults>
</compile_context>

<pallas_src>
import math

import jax
import jax.numpy as jnp
from jax import lax
from jax.experimental import pallas as pl
from jax.experimental.pallas import tpu as pltpu

_CONTRACT_LAST = (((1,), (1,)), ((), ()))   # contract last dim of both operands (no .T)


def ntm_read_head_forward(embeddings, fc_weight, fc_bias, memory, *, max_row_block=1024):
    """NTM read-head forward.

    embeddings : (..., C)  any leading dims (e.g. (T, B) controller steps x batch)
                           are flattened and handled in one pallas_call.
    fc_weight  : (M+1, C)  PyTorch nn.Linear layout (out_features, in_features).
    fc_bias    : (M+1,)
    memory     : (N, M)
    returns    : r (..., M), w (..., N)
    """
    N, M = memory.shape
    C = embeddings.shape[-1]
    lead = embeddings.shape[:-1]
    rows = int(math.prod(lead)) if lead else 1

    emb2d = jnp.asarray(embeddings, jnp.float32).reshape(rows, C)
    fc_weight = jnp.asarray(fc_weight, jnp.float32)                 # (M+1, C), fused
    bias = jnp.asarray(fc_bias, jnp.float32).reshape(1, M + 1)      # (1, M+1)

    # Hoist batch/timestep-invariant memory work: eps add + per-row L2 normalization
    # (per-operand eps clamp, matching torch.nn.functional.cosine_similarity).
    memory = jnp.asarray(memory, jnp.float32)
    mem_q = memory + jnp.float32(1e-16)
    row_sq = jnp.sum(mem_q * mem_q, axis=-1, keepdims=True)
    mem_n = mem_q * lax.rsqrt(jnp.maximum(row_sq, jnp.float32(1e-16)))   # (N, M)

    # Row tile: one big tile covering all rows if possible (grid collapses to a single
    # step -> no per-step pipeline overhead); otherwise max_row_block-row tiles.
    rows8 = -(-rows // 8) * 8                       # round up to a sublane multiple
    row_block = min(rows8, max_row_block)           # both multiples of 8
    grid_rows = -(-rows // row_block)
    rows_p = grid_rows * row_block
    if rows_p != rows:
        emb2d = jnp.pad(emb2d, ((0, rows_p - rows), (0, 0)))

    def kernel(emb_ref, wfc_ref, b_ref, mem_ref, memn_ref, out_ref):
        emb = emb_ref[...]                                           # (RB, C)

        # Fused fc_read: one MXU contraction producing (RB, M+1); split k / beta with
        # cheap lane slices (M+1 = 9 lives inside a single 128-lane tile).
        o = lax.dot_general(emb, wfc_ref[...], _CONTRACT_LAST,
                            preferred_element_type=jnp.float32) + b_ref[...]
        k = o[:, :M]                                                 # (RB, M)
        beta = jnp.logaddexp(o[:, M:M + 1], 0.0)                     # softplus, (RB, 1)

        # Cosine similarity against pre-normalized memory rows:
        #   sim = (kq . mem_row_n) / max(||kq||, 1e-8)
        kq = k + jnp.float32(1e-16)
        num = lax.dot_general(kq, memn_ref[...], _CONTRACT_LAST,
                              preferred_element_type=jnp.float32)    # (RB, N)
        k_sq = jnp.sum(kq * kq, axis=-1, keepdims=True)              # (RB, 1)
        sim = num * lax.rsqrt(jnp.maximum(k_sq, jnp.float32(1e-16))) # EUP rsqrt

        # w = softmax(beta * sim) over N — exact divide (approx reciprocal dropped).
        logits = beta * sim
        logits = logits - jnp.max(logits, axis=-1, keepdims=True)
        p = jnp.exp(logits)
        w = p / jnp.sum(p, axis=-1, keepdims=True)                   # (RB, N)

        # r = memory.read(w) = w @ memory.
        r = jnp.dot(w, mem_ref[...], preferred_element_type=jnp.float32)  # (RB, M)

        # Single lane-denser store: one (RB, M+N) output instead of two narrow ones.
        out_ref[...] = jnp.concatenate([r, w], axis=-1)

    fixed = lambda shape: pl.BlockSpec(shape, lambda i: (0, 0))      # grid-invariant

    out = pl.pallas_call(
        kernel,
        out_shape=jax.ShapeDtypeStruct((rows_p, M + N), jnp.float32),
        grid=(grid_rows,),
        in_specs=[
            pl.BlockSpec((row_block, C), lambda i: (i, 0)),          # embeddings tile
            fixed((M + 1, C)),                                       # fused fc weight
            fixed((1, M + 1)),                                       # fused fc bias
            fixed((N, M)),                                           # raw memory
            fixed((N, M)),                                           # normalized memory
        ],
        out_specs=pl.BlockSpec((row_block, M + N), lambda i: (i, 0)),
        compiler_params=pltpu.CompilerParams(
            # Only shard across TensorCores when there is real per-core work.
            dimension_semantics=(("parallel",) if grid_rows > 1 else ("arbitrary",))),
    )(emb2d, fc_weight, bias, memory, mem_n)

    r = out[:rows, :M]
    w = out[:rows, M:M + N]
    return r.reshape(*lead, M), w.reshape(*lead, N)


def _reference_forward(embeddings, fc_weight, fc_bias, memory):
    """Pure-JAX mirror of the PyTorch forward, for verification."""
    M = memory.shape[1]
    o = embeddings @ fc_weight.T + fc_bias
    k, beta = o[..., :M], o[..., M:M + 1]
    beta = jnp.logaddexp(beta, 0.0)
    kq = k + 1e-16
    mq = memory + 1e-16
    k_n = jnp.maximum(jnp.linalg.norm(kq, axis=-1, keepdims=True), 1e-8)
    m_n = jnp.maximum(jnp.linalg.norm(mq, axis=-1, keepdims=True), 1e-8)
    sim = (kq / k_n) @ (mq / m_n).T
    w = jax.nn.softmax(beta * sim, axis=-1)
    r = w @ memory
    return r, w


def _xavier_uniform(key, shape, gain):
    fan_out, fan_in = shape
    limit = gain * jnp.sqrt(6.0 / (fan_in + fan_out))
    return jax.random.uniform(key, shape, jnp.float32, -limit, limit)


if __name__ == "__main__":
    # controller_size C=32, memory N=16 rows of width M=8, batch B=2.
    # T=8 controller steps are batched into ONE pallas_call and ONE grid step.
    T, B, C, N, M = 8, 2, 32, 16, 8

    key = jax.random.PRNGKey(0)
    k_emb, k_w, k_b, k_mem = jax.random.split(key, 4)

    embeddings = jax.random.normal(k_emb, (T, B, C), jnp.float32)
    # nn.init.xavier_uniform(weight, gain=1.4); nn.init.normal(bias, std=0.01)
    fc_weight = _xavier_uniform(k_w, (M + 1, C), gain=1.4)
    fc_bias = 0.01 * jax.random.normal(k_b, (M + 1,), jnp.float32)
    memory = jax.random.uniform(k_mem, (N, M), jnp.float32, -0.1, 0.1)

    r, w = ntm_read_head_forward(embeddings, fc_weight, fc_bias, memory)
    jax.block_until_ready((r, w))

    assert r.shape == (T, B, M) and w.shape == (T, B, N)
    # Read weights are an exact softmax -> rows sum to 1.
    assert jnp.allclose(jnp.sum(w, axis=-1), 1.0, atol=1e-4)

    r_ref, w_ref = _reference_forward(embeddings, fc_weight, fc_bias, memory)
    # Loose-ish tolerances: kernel and XLA reference may use different MXU f32
    # pass counts on hardware; semantics are identical.
    assert jnp.allclose(w, w_ref, rtol=2e-2, atol=2e-4), "w mismatch vs reference"
    assert jnp.allclose(r, r_ref, rtol=2e-2, atol=2e-4), "r mismatch vs reference"

    print("KERNEL_OK")
</pallas_src>

<mosaic_0001>
module attributes {stable_mosaic.version = 11 : i64} {
  func.func @kernel(%arg0: i32, %arg1: memref<16x32xf32, #tpu.memory_space<vmem>>, %arg2: memref<9x32xf32, #tpu.memory_space<vmem>>, %arg3: memref<1x9xf32, #tpu.memory_space<vmem>>, %arg4: memref<16x8xf32, #tpu.memory_space<vmem>>, %arg5: memref<16x8xf32, #tpu.memory_space<vmem>>, %arg6: memref<16x24xf32, #tpu.memory_space<vmem>>) attributes {dimension_semantics = [#tpu.dimension_semantics<arbitrary>], iteration_bounds = array<i64: 1>, scalar_prefetch = 0 : i64, scratch_operands = 0 : i64, tpu.core_type = #tpu.core_type<tc>, window_params = [{transform_indices = @transform_0, window_bounds = array<i64: 16, 32>}, {pipeline_mode = #tpu.pipeline_mode<synchronous>, transform_indices = @transform_1, window_bounds = array<i64: 9, 32>}, {pipeline_mode = #tpu.pipeline_mode<synchronous>, transform_indices = @transform_2, window_bounds = array<i64: 1, 9>}, {pipeline_mode = #tpu.pipeline_mode<synchronous>, transform_indices = @transform_3, window_bounds = array<i64: 16, 8>}, {pipeline_mode = #tpu.pipeline_mode<synchronous>, transform_indices = @transform_4, window_bounds = array<i64: 16, 8>}, {transform_indices = @transform_5, window_bounds = array<i64: 16, 24>}]} {
    %c0 = arith.constant 0 : index
    %c0_0 = arith.constant 0 : index
    %0 = vector.load %arg1[%c0, %c0_0] : memref<16x32xf32, #tpu.memory_space<vmem>>, vector<16x32xf32>
    %c0_1 = arith.constant 0 : index
    %c0_2 = arith.constant 0 : index
    %1 = vector.load %arg2[%c0_1, %c0_2] : memref<9x32xf32, #tpu.memory_space<vmem>>, vector<9x32xf32>
    %cst = arith.constant dense<0.000000e+00> : vector<16x9xf32>
    %2 = tpu.matmul %0, %1, %cst {dimension_numbers = #tpu.dot_dimension_numbers<[1], [1], [0], [0], [0, 0, 1, 0], [], []>} : vector<16x32xf32>, vector<9x32xf32>, vector<16x9xf32> -> vector<16x9xf32>
    %c0_3 = arith.constant 0 : index
    %c0_4 = arith.constant 0 : index
    %3 = vector.load %arg3[%c0_3, %c0_4] : memref<1x9xf32, #tpu.memory_space<vmem>>, vector<1x9xf32>
    %4 = vector.broadcast %3 : vector<1x9xf32> to vector<16x9xf32>
    %5 = arith.addf %2, %4 : vector<16x9xf32>
    %6 = vector.extract_strided_slice %5 {offsets = [0, 0], sizes = [16, 8], strides = [1, 1]} : vector<16x9xf32> to vector<16x8xf32>
    %7 = vector.extract_strided_slice %5 {offsets = [0, 8], sizes = [16, 1], strides = [1, 1]} : vector<16x9xf32> to vector<16x1xf32>
    %cst_5 = arith.constant 0.000000e+00 : f32
    %8 = vector.broadcast %cst_5 : f32 to vector<16x1xf32>
    %9 = arith.maximumf %7, %8 : vector<16x1xf32>
    %10 = vector.broadcast %cst_5 : f32 to vector<16x1xf32>
    %11 = arith.subf %7, %10 : vector<16x1xf32>
    %12 = arith.cmpf one, %11, %11 : vector<16x1xf32>
    %13 = vector.broadcast %cst_5 : f32 to vector<16x1xf32>
    %14 = arith.addf %7, %13 : vector<16x1xf32>
    %15 = math.absf %11 : vector<16x1xf32>
    %cst_6 = arith.constant 0.000000e+00 : f32
    %16 = vector.broadcast %cst_6 : f32 to vector<16x1xf32>
    %17 = arith.subf %16, %15 : vector<16x1xf32>
    %18 = math.exp %17 : vector<16x1xf32>
    %19 = math.log1p %18 : vector<16x1xf32>
    %20 = arith.addf %9, %19 : vector<16x1xf32>
    %21 = arith.select %12, %14, %20 : vector<16x1xi1>, vector<16x1xf32>
    %cst_7 = arith.constant 1.000000e-16 : f32
    %22 = vector.broadcast %cst_7 : f32 to vector<16x8xf32>
    %23 = arith.addf %6, %22 : vector<16x8xf32>
    %c0_8 = arith.constant 0 : index
    %c0_9 = arith.constant 0 : index
    %24 = vector.load %arg5[%c0_8, %c0_9] : memref<16x8xf32, #tpu.memory_space<vmem>>, vector<16x8xf32>
    %cst_10 = arith.constant dense<0.000000e+00> : vector<16x16xf32>
    %25 = tpu.matmul %23, %24, %cst_10 {dimension_numbers = #tpu.dot_dimension_numbers<[1], [1], [0], [0], [0, 0, 1, 0], [], []>} : vector<16x8xf32>, vector<16x8xf32>, vector<16x16xf32> -> vector<16x16xf32>
    %26 = arith.mulf %23, %23 : vector<16x8xf32>
    %cst_11 = arith.constant dense<0.000000e+00> : vector<16xf32>
    %27 = vector.multi_reduction <add>, %26, %cst_11 [1] : vector<16x8xf32> to vector<16xf32>
    %28 = vector.shape_cast %27 : vector<16xf32> to vector<16x1xf32>
    %cst_12 = arith.constant 1.000000e-16 : f32
    %29 = vector.broadcast %cst_12 : f32 to vector<16x1xf32>
    %30 = arith.maximumf %28, %29 : vector<16x1xf32>
    %31 = math.rsqrt %30 : vector<16x1xf32>
    %32 = vector.broadcast %31 : vector<16x1xf32> to vector<16x16xf32>
    %33 = arith.mulf %25, %32 : vector<16x16xf32>
    %34 = vector.broadcast %21 : vector<16x1xf32> to vector<16x16xf32>
    %35 = arith.mulf %34, %33 : vector<16x16xf32>
    %cst_13 = arith.constant dense<0xFF800000> : vector<16xf32>
    %36 = vector.multi_reduction <maximumf>, %35, %cst_13 [1] : vector<16x16xf32> to vector<16xf32>
    %37 = vector.shape_cast %36 : vector<16xf32> to vector<16x1xf32>
    %38 = vector.broadcast %37 : vector<16x1xf32> to vector<16x16xf32>
    %39 = arith.subf %35, %38 : vector<16x16xf32>
    %40 = math.exp %39 : vector<16x16xf32>
    %cst_14 = arith.constant dense<0.000000e+00> : vector<16xf32>
    %41 = vector.multi_reduction <add>, %40, %cst_14 [1] : vector<16x16xf32> to vector<16xf32>
    %42 = vector.shape_cast %41 : vector<16xf32> to vector<16x1xf32>
    %43 = vector.broadcast %42 : vector<16x1xf32> to vector<16x16xf32>
    %44 = arith.divf %40, %43 : vector<16x16xf32>
    %c0_15 = arith.constant 0 : index
    %c0_16 = arith.constant 0 : index
    %45 = vector.load %arg4[%c0_15, %c0_16] : memref<16x8xf32, #tpu.memory_space<vmem>>, vector<16x8xf32>
    %cst_17 = arith.constant dense<0.000000e+00> : vector<16x8xf32>
    %46 = tpu.matmul %44, %45, %cst_17 {dimension_numbers = #tpu.dot_dimension_numbers<[1], [0], [0], [1], [0, 0, 1, 1], [], []>} : vector<16x16xf32>, vector<16x8xf32>, vector<16x8xf32> -> vector<16x8xf32>
    %47 = tpu.concatenate %46, %44 in 1 : vector<16x8xf32>, vector<16x16xf32> -> vector<16x24xf32>
    %c0_18 = arith.constant 0 : index
    %c0_19 = arith.constant 0 : index
    %48 = vector.load %arg6[%c0_18, %c0_19] : memref<16x24xf32, #tpu.memory_space<vmem>>, vector<16x24xf32>
    tpu.vector_store %arg6[%c0_18, %c0_19], %47 {strides = array<i32>} : memref<16x24xf32, #tpu.memory_space<vmem>>, vector<16x24xf32>,
    return
  }
  func.func @transform_0(%arg0: i32) -> (i32, i32) {
    %c0_i32 = arith.constant 0 : i32
    %c0_i32_0 = arith.constant 0 : i32
    return %arg0, %c0_i32 : i32, i32
  }
  func.func @transform_1(%arg0: i32) -> (i32, i32) {
    %c0_i32 = arith.constant 0 : i32
    %c0_i32_0 = arith.constant 0 : i32
    %c0_i32_1 = arith.constant 0 : i32
    return %c0_i32, %c0_i32_0 : i32, i32
  }
  func.func @transform_2(%arg0: i32) -> (i32, i32) {
    %c0_i32 = arith.constant 0 : i32
    %c0_i32_0 = arith.constant 0 : i32
    %c0_i32_1 = arith.constant 0 : i32
    return %c0_i32, %c0_i32_0 : i32, i32
  }
  func.func @transform_3(%arg0: i32) -> (i32, i32) {
    %c0_i32 = arith.constant 0 : i32
    %c0_i32_0 = arith.constant 0 : i32
    %c0_i32_1 = arith.constant 0 : i32
    return %c0_i32, %c0_i32_0 : i32, i32
  }
  func.func @transform_4(%arg0: i32) -> (i32, i32) {
    %c0_i32 = arith.constant 0 : i32
    %c0_i32_0 = arith.constant 0 : i32
    %c0_i32_1 = arith.constant 0 : i32
    return %c0_i32, %c0_i32_0 : i32, i32
  }
  func.func @transform_5(%arg0: i32) -> (i32, i32) {
    %c0_i32 = arith.constant 0 : i32
    %c0_i32_0 = arith.constant 0 : i32
    return %arg0, %c0_i32 : i32, i32
  }
}

</mosaic_0001>

<llo_original>
// kernel: tpu_custom_call.1
$region0: #{tpu_custom_call.1}
  #allocation0 [shape = 'u32[]', space=smem, size = 0x4, offset = 0x4, fixed_abs, tag = 'smem constant byte address 0x4 - core index']
  #allocation1 [shape = 'u32[144,128]{1,0:T(1,128)}', space=vmem, size = 0x12000, scoped, tag = 'internal scratch']
  %s0 = inlined_call_operand.vmem [shape: f32[16,32], index: 0, kind: input, shape index: {}]
  %s1 = inlined_call_operand.vmem [shape: f32[9,32], index: 1, kind: input, shape index: {}]
  %s2 = inlined_call_operand.vmem [shape: f32[1,9], index: 2, kind: input, shape index: {}]
  %s3 = inlined_call_operand.vmem [shape: f32[16,8], index: 3, kind: input, shape index: {}]
  %s4 = inlined_call_operand.vmem [shape: f32[16,8], index: 4, kind: input, shape index: {}]
  %s5 = inlined_call_operand.hbm [shape: f32[16,24], index: 5, kind: output, shape index: {}]
  %s6 = sld [smem:[#allocation0]]
  $region30: #{tpu_custom_call.1} parent=0
    _
  %s8 = ssub.s32 1, %s6
  %s9 = scalar_select 0, %s8, %s6
  $region1: #{tpu_custom_call.1} parent=0
    #allocation2 [shape = 'u8[8192]{0}', space=vmem, size = 0x2000, scoped, tag = 'output window, operand 0, single buffered']
    #allocation3 [shape = 's32[1]{0}', space=sflag, size = 0x4, scoped, tag = 'scoped memory for tpu_custom_call.1']
    %10 = vsyncpa [#allocation3], 0
    // Predicated region
    $region2: #{tpu_custom_call.1} parent=1 // pred_check
      _
    $region3: #{tpu_custom_call.1} parent=1 // pred_check_branch
      %12 = sbr.rel (0) target = $region5
    $region4: #{tpu_custom_call.1} parent=1 // pred_region
      _
    $region5: #{tpu_custom_call.1} parent=1 // pred_fallthru
      _
    // Predicated region
    $region6: #{tpu_custom_call.1} parent=1 // pred_check
      _
    $region7: #{tpu_custom_call.1} parent=1 // pred_check_branch
      %14 = sbr.rel (0) target = $region9
    $region8: #{tpu_custom_call.1} parent=1 // pred_region
      _
    $region9: #{tpu_custom_call.1} parent=1 // pred_fallthru
      _
    // Predicated region
    $region10: #{tpu_custom_call.1} parent=1 // pred_check
      _
    $region11: #{tpu_custom_call.1} parent=1 // pred_check_branch
      %16 = sbr.rel (0) target = $region13
    $region12: #{tpu_custom_call.1} parent=1 // pred_region
      _
    $region13: #{tpu_custom_call.1} parent=1 // pred_fallthru
      _
    // Predicated region
    $region14: #{tpu_custom_call.1} parent=1 // pred_check
      _
    $region15: #{tpu_custom_call.1} parent=1 // pred_check_branch
      %18 = sbr.rel (0) target = $region17
    $region16: #{tpu_custom_call.1} parent=1 // pred_region
      _
    $region17: #{tpu_custom_call.1} parent=1 // pred_fallthru
      _
    // Predicated region
    $region18: #{tpu_custom_call.1} parent=1 // pred_check
      _
    $region19: #{tpu_custom_call.1} parent=1 // pred_check_branch
      %20 = sbr.rel (0) target = $region21
    $region20: #{tpu_custom_call.1} parent=1 // pred_region
      _
    $region21: #{tpu_custom_call.1} parent=1 // pred_fallthru
      _
    %v21 = vld [vmem:[%s0] sm:$0xff]
    %v22 = vld [vmem:[%s0 + $0x8] sm:$0xff]
    %v23 = vld [vmem:[%s1] sm:$0xff]
    %v24 = vld [vmem:[%s1 + $0x8] sm:$0x1]
    %v25 = vld [vmem:[%s2] sm:$0x1]
    %v27 = vlaneseq
    %v28 = vshrl.u32 %v27, 7
    %v29 = vsub.s32 0, %v28
    %v30 = vrot.slane %v25, %v29
    %vm32 = vcmask 261120
    %v34 = vsel %vm32, %v21, 0
    %v37 = vsel %vm32, %v22, 0
    %v40 = vsel %vm32, %v23, 0
    %v43 = vsel %vm32, %v24, 0
    %45 = vmatprep.subr.mxu0 0.0
    %46 = vmatpush1.xpose.msra.mxu0 0.0
    %47 = vmatprep.subr.mxu0 0.0
    %48 = vmatpush1.xpose.msra.mxu0 0.0
    %49 = vmatprep.subr.mxu0 0.0
    %50 = vmatpush1.xpose.msra.mxu0 0.0
    %51 = vmatprep.subr.mxu0 0.0
    %52 = vmatpush1.xpose.msra.mxu0 0.0
    %53 = vmatprep.subr.mxu0 0.0
    %54 = vmatpush1.xpose.msra.mxu0 0.0
    %55 = vmatprep.subr.mxu0 0.0
    %56 = vmatpush1.xpose.msra.mxu0 0.0
    %57 = vmatprep.subr.mxu0 0.0
    %58 = vmatpush1.xpose.msra.mxu0 0.0
    %59 = vmatprep.subr.mxu0 0.0
    %60 = vmatpush1.xpose.msra.mxu0 0.0
    %61 = vmatprep.subr.mxu0 0.0
    %62 = vmatpush1.xpose.msra.mxu0 0.0
    %63 = vmatprep.subr.mxu0 0.0
    %64 = vmatpush1.xpose.msra.mxu0 0.0
    %65 = vmatprep.subr.mxu0 0.0
    %66 = vmatpush1.xpose.msra.mxu0 0.0
    %67 = vmatprep.subr.mxu0 0.0
    %68 = vmatpush1.xpose.msra.mxu0 0.0
    %69 = vmatprep.subr.mxu0 0.0
    %70 = vmatpush1.xpose.msra.mxu0 0.0
    %71 = vmatprep.subr.mxu0 0.0
    %72 = vmatpush1.xpose.msra.mxu0 0.0
    %73 = vmatprep.subr.mxu0 0.0
    %74 = vmatpush1.xpose.msra.mxu0 %v43
    %75 = vmatprep.subr.mxu0 0.0
    %76 = vmatpush1.xpose.msra.mxu0 %v40
    %77 = vmatprep.subr.mxu0 0.0
    %78 = vmatpush2.xpose.msra.mxu0 0.0
    %79 = vmatprep.subr.mxu0 0.0
    %80 = vmatpush2.xpose.msra.mxu0 0.0
    %81 = vmatprep.subr.mxu0 0.0
    %82 = vmatpush2.xpose.msra.mxu0 0.0
    %83 = vmatprep.subr.mxu0 0.0
    %84 = vmatpush2.xpose.msra.mxu0 0.0
    %85 = vmatprep.subr.mxu0 0.0
    %86 = vmatpush2.xpose.msra.mxu0 0.0
    %87 = vmatprep.subr.mxu0 0.0
    %88 = vmatpush2.xpose.msra.mxu0 0.0
    %89 = vmatprep.subr.mxu0 0.0
    %90 = vmatpush2.xpose.msra.mxu0 0.0
    %91 = vmatprep.subr.mxu0 0.0
    %92 = vmatpush2.xpose.msra.mxu0 0.0
    %93 = vmatprep.subr.mxu0 0.0
    %94 = vmatpush2.xpose.msra.mxu0 0.0
    %95 = vmatprep.subr.mxu0 0.0
    %96 = vmatpush2.xpose.msra.mxu0 0.0
    %97 = vmatprep.subr.mxu0 0.0
    %98 = vmatpush2.xpose.msra.mxu0 0.0
    %99 = vmatprep.subr.mxu0 0.0
    %100 = vmatpush2.xpose.msra.mxu0 0.0
    %101 = vmatprep.subr.mxu0 0.0
    %102 = vmatpush2.xpose.msra.mxu0 0.0
    %103 = vmatprep.subr.mxu0 0.0
    %104 = vmatpush2.xpose.msra.mxu0 0.0
    %105 = vmatprep.subr.mxu0 0.0
    %106 = vmatpush2.xpose.msra.mxu0 0.0
    %107 = vmatprep.subr.mxu0 0.0
    %108 = vmatpush2.xpose.msra.mxu0 0.0
    %109 = vmatprep.mubr.f32.mxu0 0.0
    %110 = vmatmul.mubr.f32.gmra.mxu0 %v34
    %v111 = vpop.f32.mrf.mxu0
    %v112 = vadd.f32 %v30, %v111
    %v113 = vpop.f32.mrf.mxu0
    %114 = vmatprep.mubr.f32.mxu0 0.0
    %115 = vmatmul.mubr.f32.gmra.mxu0 %v37
    %v116 = vpop.f32.mrf.mxu0
    %v117 = vadd.f32 %v30, %v116
    %v118 = vpop.f32.mrf.mxu0
    %119 = vdwg.mxu0
    %v120 = vmax.f32 %v112, 0.0
    %v121 = vmax.f32 %v117, 0.0
    %vm122 = vcmp.ne.f32.partialorder %v112, %v112
    %vm123 = vcmp.ne.f32.partialorder %v117, %v117
    %v124 = vadd.f32 %v112, 0.0
    %v125 = vadd.f32 %v117, 0.0
    %v126 = vand.u32 2147483647, %v112
    %v127 = vand.u32 2147483647, %v117
    %v128 = vsub.f32 0.0, %v126
    %v129 = vsub.f32 0.0, %v127
    %v130 = vmul.f32 %v128, 1.442695
    %v131 = vpow.pop %v130
    %v132 = vmul.f32 %v129, 1.442695
    %v133 = vpow.pop %v132
    %v134 = vadd.f32 %v131, 1.0
    %v135 = vlog2.pop %v134
    %v136 = vmul.f32 %v135, 0.6931472
    %v137 = vmul.f32 -0.5, %v131
    %v138 = vadd.f32 %v137, 1.0
    %v139 = vmul.f32 %v138, %v131
    %v140 = vand.u32 2147483647, %v131
    %vm141 = vcmp.lt.f32.partialorder %v140, 0.0004427343
    %v142 = vsel %vm141, %v139, %v136
    %v143 = vadd.f32 %v133, 1.0
    %v144 = vlog2.pop %v143
    %v145 = vmul.f32 %v144, 0.6931472
    %v146 = vmul.f32 -0.5, %v133
    %v147 = vadd.f32 %v146, 1.0
    %v148 = vmul.f32 %v147, %v133
    %v149 = vand.u32 2147483647, %v133
    %vm150 = vcmp.lt.f32.partialorder %v149, 0.0004427343
    %v151 = vsel %vm150, %v148, %v145
    %v152 = vadd.f32 %v120, %v142
    %v153 = vadd.f32 %v121, %v151
    %v154 = vsel %vm122, %v124, %v152
    %v155 = vsel %vm123, %v125, %v153
    %v156 = vadd.f32 %v112, 1e-16
    %v157 = vadd.f32 %v117, 1e-16
    %v158 = vld [vmem:[%s4] sm:$0xff]
    %v159 = vld [vmem:[%s4 + $0x8] sm:$0xff]
    %vm160 = vcmask 64512
    %v162 = vsel %vm160, %v156, 0
    %v165 = vsel %vm160, %v157, 0
    %v168 = vsel %vm160, %v158, 0
    %v171 = vsel %vm160, %v159, 0
    %173 = vmatprep.subr.mxu0 0.0
    %174 = vmatpush1.xpose.msra.mxu0 0.0
    %175 = vmatprep.subr.mxu0 0.0
    %176 = vmatpush1.xpose.msra.mxu0 0.0
    %177 = vmatprep.subr.mxu0 0.0
    %178 = vmatpush1.xpose.msra.mxu0 0.0
    %179 = vmatprep.subr.mxu0 0.0
    %180 = vmatpush1.xpose.msra.mxu0 0.0
    %181 = vmatprep.subr.mxu0 0.0
    %182 = vmatpush1.xpose.msra.mxu0 0.0
    %183 = vmatprep.subr.mxu0 0.0
    %184 = vmatpush1.xpose.msra.mxu0 0.0
    %185 = vmatprep.subr.mxu0 0.0
    %186 = vmatpush1.xpose.msra.mxu0 0.0
    %187 = vmatprep.subr.mxu0 0.0
    %188 = vmatpush1.xpose.msra.mxu0 0.0
    %189 = vmatprep.subr.mxu0 0.0
    %190 = vmatpush1.xpose.msra.mxu0 0.0
    %191 = vmatprep.subr.mxu0 0.0
    %192 = vmatpush1.xpose.msra.mxu0 0.0
    %193 = vmatprep.subr.mxu0 0.0
    %194 = vmatpush1.xpose.msra.mxu0 0.0
    %195 = vmatprep.subr.mxu0 0.0
    %196 = vmatpush1.xpose.msra.mxu0 0.0
    %197 = vmatprep.subr.mxu0 0.0
    %198 = vmatpush1.xpose.msra.mxu0 0.0
    %199 = vmatprep.subr.mxu0 0.0
    %200 = vmatpush1.xpose.msra.mxu0 0.0
    %201 = vmatprep.subr.mxu0 0.0
    %202 = vmatpush1.xpose.msra.mxu0 %v171
    %203 = vmatprep.subr.mxu0 0.0
    %204 = vmatpush1.xpose.msra.mxu0 %v168
    %205 = vmatprep.subr.mxu0 0.0
    %206 = vmatpush2.xpose.msra.mxu0 0.0
    %207 = vmatprep.subr.mxu0 0.0
    %208 = vmatpush2.xpose.msra.mxu0 0.0
    %209 = vmatprep.subr.mxu0 0.0
    %210 = vmatpush2.xpose.msra.mxu0 0.0
    %211 = vmatprep.subr.mxu0 0.0
    %212 = vmatpush2.xpose.msra.mxu0 0.0
    %213 = vmatprep.subr.mxu0 0.0
    %214 = vmatpush2.xpose.msra.mxu0 0.0
    %215 = vmatprep.subr.mxu0 0.0
    %216 = vmatpush2.xpose.msra.mxu0 0.0
    %217 = vmatprep.subr.mxu0 0.0
    %218 = vmatpush2.xpose.msra.mxu0 0.0
    %219 = vmatprep.subr.mxu0 0.0
    %220 = vmatpush2.xpose.msra.mxu0 0.0
    %221 = vmatprep.subr.mxu0 0.0
    %222 = vmatpush2.xpose.msra.mxu0 0.0
    %223 = vmatprep.subr.mxu0 0.0
    %224 = vmatpush2.xpose.msra.mxu0 0.0
    %225 = vmatprep.subr.mxu0 0.0
    %226 = vmatpush2.xpose.msra.mxu0 0.0
    %227 = vmatprep.subr.mxu0 0.0
    %228 = vmatpush2.xpose.msra.mxu0 0.0
    %229 = vmatprep.subr.mxu0 0.0
    %230 = vmatpush2.xpose.msra.mxu0 0.0
    %231 = vmatprep.subr.mxu0 0.0
    %232 = vmatpush2.xpose.msra.mxu0 0.0
    %233 = vmatprep.subr.mxu0 0.0
    %234 = vmatpush2.xpose.msra.mxu0 0.0
    %235 = vmatprep.subr.mxu0 0.0
    %236 = vmatpush2.xpose.msra.mxu0 0.0
    %237 = vmatprep.mubr.f32.mxu0 0.0
    %238 = vmatmul.mubr.f32.gmra.mxu0 %v162
    %v239 = vpop.f32.mrf.mxu0
    %v240 = vadd.f32 0.0, %v239
    %v241 = vpop.f32.mrf.mxu0
    %242 = vmatprep.mubr.f32.mxu0 0.0
    %243 = vmatmul.mubr.f32.gmra.mxu0 %v165
    %v244 = vpop.f32.mrf.mxu0
    %v245 = vadd.f32 0.0, %v244
    %v246 = vpop.f32.mrf.mxu0
    %247 = vdwg.mxu0
    %v248 = vmul.f32 %v156, %v156
    %v249 = vmul.f32 %v157, %v157
    %v250 = vsel %vm160, %v248, 0.0
    %251 = vadd.xlane.f32.xlu0 %v250
    %v252 = vpop.xlane.xlu0 %251
    %v253 = vsel %vm160, %v249, 0.0
    %254 = vadd.xlane.f32.xlu0 %v253
    %v255 = vpop.xlane.xlu0 %254
    %v256 = vmax.f32 %v252, 1e-16
    %v257 = vmax.f32 %v255, 1e-16
    %v258 = vrsqrt.pop %v256
    %v259 = vrsqrt.pop %v257
    %v260 = vmul.f32 %v240, %v258
    %v261 = vmul.f32 %v245, %v259
    %263 = vset.pattern.permute.xlu0 8
    %264 = vperm.xlu0 %263, %v154
    %v265 = vpop.permute.xlu0 %264
    %268 = vset.pattern.permute.xlu0 8
    %269 = vperm.xlu0 %268, %v155
    %v270 = vpop.permute.xlu0 %269
    %v272 = vmul.f32 %v265, %v260
    %v273 = vmul.f32 %v270, %v261
    %vm274 = vcmask 130048
    %v275 = vsel %vm274, %v272, -inf
    %276 = vmax.xlane.f32.xlu0 %v275
    %v277 = vpop.xlane.xlu0 %276
    %v278 = vsel %vm274, %v273, -inf
    %279 = vmax.xlane.f32.xlu0 %v278
    %v280 = vpop.xlane.xlu0 %279
    %v281 = vsub.f32 %v272, %v277
    %v282 = vsub.f32 %v273, %v280
    %v283 = vmul.f32 %v281, 1.442695
    %v284 = vpow.pop %v283
    %v285 = vmul.f32 %v282, 1.442695
    %v286 = vpow.pop %v285
    %v287 = vsel %vm274, %v284, 0.0
    %288 = vadd.xlane.f32.xlu0 %v287
    %v289 = vpop.xlane.xlu0 %288
    %v290 = vsel %vm274, %v286, 0.0
    %291 = vadd.xlane.f32.xlu0 %v290
    %v292 = vpop.xlane.xlu0 %291
    %v293 = vrcp.pop %v289
    %v294 = vmul.f32 %v284, %v293
    %v295 = vrcp.pop %v292
    %v296 = vmul.f32 %v286, %v295
    %v297 = vld [vmem:[%s3] sm:$0xff]
    %v298 = vld [vmem:[%s3 + $0x8] sm:$0xff]
    %v300 = vsel %vm274, %v294, 0
    %v303 = vsel %vm274, %v296, 0
    %305 = vmatprep.subr.mxu0 0.0
    %306 = vmatpush1.msra.mxu0 0.0
    %307 = vmatprep.subr.mxu0 0.0
    %308 = vmatpush1.msra.mxu0 0.0
    %309 = vmatprep.subr.mxu0 0.0
    %310 = vmatpush1.msra.mxu0 0.0
    %311 = vmatprep.subr.mxu0 0.0
    %312 = vmatpush1.msra.mxu0 0.0
    %313 = vmatprep.subr.mxu0 0.0
    %314 = vmatpush1.msra.mxu0 0.0
    %315 = vmatprep.subr.mxu0 0.0
    %316 = vmatpush1.msra.mxu0 0.0
    %317 = vmatprep.subr.mxu0 0.0
    %318 = vmatpush1.msra.mxu0 0.0
    %319 = vmatprep.subr.mxu0 0.0
    %320 = vmatpush1.msra.mxu0 0.0
    %321 = vmatprep.subr.mxu0 0.0
    %322 = vmatpush1.msra.mxu0 0.0
    %323 = vmatprep.subr.mxu0 0.0
    %324 = vmatpush1.msra.mxu0 0.0
    %325 = vmatprep.subr.mxu0 0.0
    %326 = vmatpush1.msra.mxu0 0.0
    %327 = vmatprep.subr.mxu0 0.0
    %328 = vmatpush1.msra.mxu0 0.0
    %329 = vmatprep.subr.mxu0 0.0
    %330 = vmatpush1.msra.mxu0 0.0
    %331 = vmatprep.subr.mxu0 0.0
    %332 = vmatpush1.msra.mxu0 0.0
    %333 = vmatprep.subr.mxu0 0.0
    %334 = vmatpush1.msra.mxu0 %v298
    %335 = vmatprep.subr.mxu0 0.0
    %336 = vmatpush1.msra.mxu0 %v297
    %337 = vmatprep.subr.mxu0 0.0
    %338 = vmatpush2.msra.mxu0 0.0
    %339 = vmatprep.subr.mxu0 0.0
    %340 = vmatpush2.msra.mxu0 0.0
    %341 = vmatprep.subr.mxu0 0.0
    %342 = vmatpush2.msra.mxu0 0.0
    %343 = vmatprep.subr.mxu0 0.0
    %344 = vmatpush2.msra.mxu0 0.0
    %345 = vmatprep.subr.mxu0 0.0
    %346 = vmatpush2.msra.mxu0 0.0
    %347 = vmatprep.subr.mxu0 0.0
    %348 = vmatpush2.msra.mxu0 0.0
    %349 = vmatprep.subr.mxu0 0.0
    %350 = vmatpush2.msra.mxu0 0.0
    %351 = vmatprep.subr.mxu0 0.0
    %352 = vmatpush2.msra.mxu0 0.0
    %353 = vmatprep.subr.mxu0 0.0
    %354 = vmatpush2.msra.mxu0 0.0
    %355 = vmatprep.subr.mxu0 0.0
    %356 = vmatpush2.msra.mxu0 0.0
    %357 = vmatprep.subr.mxu0 0.0
    %358 = vmatpush2.msra.mxu0 0.0
    %359 = vmatprep.subr.mxu0 0.0
    %360 = vmatpush2.msra.mxu0 0.0
    %361 = vmatprep.subr.mxu0 0.0
    %362 = vmatpush2.msra.mxu0 0.0
    %363 = vmatprep.subr.mxu0 0.0
    %364 = vmatpush2.msra.mxu0 0.0
    %365 = vmatprep.subr.mxu0 0.0
    %366 = vmatpush2.msra.mxu0 0.0
    %367 = vmatprep.subr.mxu0 0.0
    %368 = vmatpush2.msra.mxu0 0.0
    %369 = vmatprep.mubr.f32.mxu0 0.0
    %370 = vmatmul.mubr.f32.gmra.mxu0 %v300
    %v371 = vpop.f32.mrf.mxu0
    %v372 = vadd.f32 0.0, %v371
    %v373 = vpop.f32.mrf.mxu0
    %374 = vmatprep.mubr.f32.mxu0 0.0
    %375 = vmatmul.mubr.f32.gmra.mxu0 %v303
    %v376 = vpop.f32.mrf.mxu0
    %v377 = vadd.f32 0.0, %v376
    %v378 = vpop.f32.mrf.mxu0
    %379 = vdwg.mxu0
    %380 = vrot.lane.b32.xlu0 %v294, 8
    %v381 = vpop.permute.xlu0 %380
    %382 = vrot.lane.b32.xlu0 %v296, 8
    %v383 = vpop.permute.xlu0 %382
    %v386 = vsel %vm160, %v372, %v381
    %v387 = vsel %vm160, %v377, %v383
    %vm388 = vcmask 195584
    %389 = vst.msk [vmem:[#allocation2] sm:$0xff] %vm388, %v386
    %390 = vst.msk [vmem:[#allocation2 + $0x8] sm:$0xff] %vm388, %v387
    // Predicated region
    $region22: #{tpu_custom_call.1} parent=1 // pred_check
      _
    $region23: #{tpu_custom_call.1} parent=1 // pred_check_branch
      %392 = sbr.rel (0) target = $region25
    $region24: #{tpu_custom_call.1} parent=1 // pred_region
      %s394 = ssub.s32 256, 256
      %395 = vsyncadd [#allocation3], %s394
      %s396 = sshll.u32 [#allocation2], 4
      %s397 = int_to_ptr.vmem [resolvable:$true] %s396
      %402 = dma.vmem_to_hbm [thread:$0]  %s397, 256, %s5, [#allocation3], 128, 128, 8
    $region25: #{tpu_custom_call.1} parent=1 // pred_fallthru
      _
    // Predicated region
    $region26: #{tpu_custom_call.1} parent=1 // pred_check
      _
    $region27: #{tpu_custom_call.1} parent=1 // pred_check_branch
      %404 = sbr.rel (0) target = $region29
    $region28: #{tpu_custom_call.1} parent=1 // pred_region
      %405 = dma.done [#allocation3], 256
    $region29: #{tpu_custom_call.1} parent=1 // pred_fallthru
      _
    %406 = vsyncpa [#allocation3], 1

</llo_original>
